<compile_context>
chip_gen: v5e
topology: v5e:2x2
jax: 0.10.0
libtpu: 0.0.40
codegen_flags: <defaults>
</compile_context>

<pallas_src>
import jax
import jax.numpy as jnp
from jax.experimental import pallas as pl
from jax.experimental.pallas import tpu as pltpu

LN_EPS = 1e-5                 # torch.nn.LayerNorm default eps
_MAX_TILE_ROWS = 1024


# --------------------------------------------------------------------------- #
# Hardware-aware sizing helpers (all trace-time Python).
# --------------------------------------------------------------------------- #
def _vmem_config():
    """(vmem_limit_bytes, working-set budget) derived from the chip generation.
    v5e/v6e: 128 MiB VMEM -> 96/48 MiB; v7x: 64 MiB/TC -> 48/24 MiB."""
    try:
        cap = int(pltpu.get_tpu_info().vmem_capacity_bytes)
    except Exception:
        cap = 64 * 1024 * 1024          # conservative fallback (v7x per-TC)
    limit = min((cap * 3) // 4, 96 * 1024 * 1024)
    return int(limit), int(limit // 2)


def _num_tensorcores():
    """2 for megacore chips (v4 / v5p / v7x), else 1 (v5e / v6e)."""
    try:
        kind = jax.devices()[0].device_kind.lower()
    except Exception:
        return 1
    if any(tag in kind for tag in ("v4", "v5p", "v7", "7x")):
        return 2
    return 1


def _choose_rows_tile(rows, per_row_bytes, avail_bytes, pack, num_cores):
    """Largest row tile whose full working set (double-buffered I/O + in-kernel
    intermediates) fits `avail_bytes`; `pack` keeps sublane/MXU alignment."""
    avail = max(int(avail_bytes), 1 << 20)
    tm = min(avail // max(int(per_row_bytes), 1), _MAX_TILE_ROWS)
    tm = max((tm // pack) * pack, pack)
    if num_cores > 1:
        # Keep enough grid steps for the "parallel" row axis to shard across
        # TensorCores; pointless (pure per-step overhead) on 1-TC v5e/v6e.
        per_core = pl.cdiv(rows, 4 * num_cores)
        if per_core >= 2 * pack:
            tm = min(tm, max((per_core // pack) * pack, pack))
    if tm >= rows:
        return int(rows)                # single block covering all rows
    return int(tm)


def _choose_dout_tile(d, d_out, budget):
    """Output-feature tile for the fused projection.  Small/medium weights stay
    fully VMEM-resident (single-buffered bf16); MLP-size weights are streamed in
    lane-aligned (d, tn) chunks capped at ~1/3 of the budget (double-buffered)."""
    w_cap = budget // 3
    if d_out <= 256 or d * d_out * 2 <= w_cap:
        return int(d_out)
    tn = max(((w_cap // (4 * d)) // 128) * 128, 128)
    return int(min(tn, d_out))


# --------------------------------------------------------------------------- #
# Kernels.
# --------------------------------------------------------------------------- #
def _layernorm_rows(x, gamma, beta):
    """Rows of x are normalized independently.  Single pass over x: mean and
    mean-of-squares share the data (one fewer XLU reduction per row)."""
    mean = jnp.mean(x, axis=-1, keepdims=True)
    mean_sq = jnp.mean(x * x, axis=-1, keepdims=True)
    var = jnp.maximum(mean_sq - mean * mean, 0.0)
    inv = jax.lax.rsqrt(var + LN_EPS)
    return (x - mean) * inv * gamma + beta


def _layernorm_kernel(x_ref, g_ref, b_ref, o_ref):
    x = x_ref[...].astype(jnp.float32)
    y = _layernorm_rows(x, g_ref[...].astype(jnp.float32),
                        b_ref[...].astype(jnp.float32))
    o_ref[...] = y.astype(o_ref.dtype)


def _prenorm_linear_kernel(x_ref, g_ref, b_ref, w_ref, wb_ref, o_ref):
    # Fused LayerNorm + linear projection: `normed` never round-trips HBM.
    x = x_ref[...].astype(jnp.float32)
    y = _layernorm_rows(x, g_ref[...].astype(jnp.float32),
                        b_ref[...].astype(jnp.float32))
    # bf16 operands -> full-rate MXU on v6e/v7x; accumulate in f32.
    proj = jnp.dot(y.astype(jnp.bfloat16), w_ref[...],
                   preferred_element_type=jnp.float32)
    o_ref[...] = (proj + wb_ref[...].astype(jnp.float32)).astype(o_ref.dtype)


# --------------------------------------------------------------------------- #
# Wrappers.
# --------------------------------------------------------------------------- #
@jax.jit
def layernorm_pallas(x, gamma, beta):
    """LayerNorm over the last dim of x (any leading dims)."""
    orig_shape = x.shape
    d = int(orig_shape[-1])
    x2 = x.reshape(-1, d)
    rows = int(x2.shape[0])
    itemsize = jnp.dtype(x.dtype).itemsize
    pack = 16 if itemsize == 2 else 8

    limit, budget = _vmem_config()
    # Double-buffered in+out tiles + ~2 f32 intermediate tiles per row.
    per_row = 2 * (2 * d * itemsize) + 8 * d
    tm = _choose_rows_tile(rows, per_row, budget, pack, _num_tensorcores())
    grid = (pl.cdiv(rows, tm),)          # ragged last block: OOB rows dropped on write

    cost = pl.CostEstimate(
        flops=int(9 * rows * d),
        transcendentals=int(rows),
        bytes_accessed=int(2 * rows * d * itemsize + 2 * d * 4),
    )

    out = pl.pallas_call(
        _layernorm_kernel,
        out_shape=jax.ShapeDtypeStruct((rows, d), x.dtype),
        grid_spec=pltpu.PrefetchScalarGridSpec(
            num_scalar_prefetch=0,
            grid=grid,
            in_specs=[
                pl.BlockSpec((tm, d), lambda i: (i, 0)),
                # Grid-invariant params: single-buffered.
                pl.BlockSpec((1, d), lambda i: (0, 0), pipeline_mode=pl.Buffered(1)),
                pl.BlockSpec((1, d), lambda i: (0, 0), pipeline_mode=pl.Buffered(1)),
            ],
            out_specs=pl.BlockSpec((tm, d), lambda i: (i, 0)),
        ),
        compiler_params=pltpu.CompilerParams(
            dimension_semantics=("parallel",),
            vmem_limit_bytes=limit,
        ),
        cost_estimate=cost,
    )(x2, gamma.reshape(1, d), beta.reshape(1, d))
    return out.reshape(orig_shape)


@jax.jit
def prenorm_linear_pallas(x, gamma, beta, w, wb):
    """Fused fn(LayerNorm(x)) for fn(y) = y @ w + wb (projection on the MXU)."""
    orig_shape = x.shape
    d = int(orig_shape[-1])
    d_out = int(w.shape[-1])
    x2 = x.reshape(-1, d)
    rows = int(x2.shape[0])
    itemsize = jnp.dtype(x.dtype).itemsize

    limit, budget = _vmem_config()
    ncores = _num_tensorcores()
    w_bf16 = w.astype(jnp.bfloat16)      # halves weight DMA/VMEM, full-rate MXU

    # Output-feature tile (streams MLP-size weights on v7x; else fully resident).
    tn = _choose_dout_tile(d, d_out, budget)
    n_j = pl.cdiv(d_out, tn)

    # Row tile: count double-buffered x/out tiles, resident weight, and the
    # in-kernel intermediates (x_f32 + y + bf16(y) + f32 proj accumulator).
    w_buffers = 1 if n_j == 1 else 2
    resident = w_buffers * d * tn * 2 + 2 * d * 4 + 2 * tn * 4
    per_row = 2 * d * itemsize + 2 * tn * itemsize + 10 * d + 4 * tn
    tm = _choose_rows_tile(rows, per_row, budget - resident, 256, ncores)
    n_i = pl.cdiv(rows, tm)

    cost = pl.CostEstimate(
        flops=int(2 * rows * d * d_out + 9 * rows * d),
        transcendentals=int(rows),
        bytes_accessed=int(rows * d * itemsize + rows * d_out * itemsize
                           + n_i * d * d_out * 2 + 2 * d * 4 + d_out * 4),
    )

    if n_j == 1:
        # Weight fully resident and single-buffered.
        w_spec = pl.BlockSpec((d, tn), lambda i, j: (0, 0),
                              pipeline_mode=pl.Buffered(1))
    else:
        # Weight streamed along d_out (double-buffered so DMA hides under MXU).
        w_spec = pl.BlockSpec((d, tn), lambda i, j: (0, j))

    out = pl.pallas_call(
        _prenorm_linear_kernel,
        out_shape=jax.ShapeDtypeStruct((rows, d_out), x.dtype),
        grid_spec=pltpu.PrefetchScalarGridSpec(
            num_scalar_prefetch=0,
            grid=(n_i, n_j),
            in_specs=[
                pl.BlockSpec((tm, d), lambda i, j: (i, 0)),
                pl.BlockSpec((1, d), lambda i, j: (0, 0), pipeline_mode=pl.Buffered(1)),
                pl.BlockSpec((1, d), lambda i, j: (0, 0), pipeline_mode=pl.Buffered(1)),
                w_spec,
                pl.BlockSpec((1, tn), lambda i, j: (0, j)),
            ],
            out_specs=pl.BlockSpec((tm, tn), lambda i, j: (i, j)),
        ),
        compiler_params=pltpu.CompilerParams(
            dimension_semantics=("parallel", "arbitrary"),
            vmem_limit_bytes=limit,
        ),
        cost_estimate=cost,
    )(x2, gamma.reshape(1, d), beta.reshape(1, d), w_bf16, wb.reshape(1, d_out))
    return out.reshape(orig_shape[:-1] + (d_out,))


# --------------------------------------------------------------------------- #
# Module mirrors.
# --------------------------------------------------------------------------- #
class LinearFn:
    """Deterministic stand-in for the first projection inside Attention (to_qkv,
    d_out = 3*D) or FeedForward (first linear, d_out = 4*D) — route those through
    this class so they hit the fused PreNorm+projection kernel."""

    def __init__(self, weight, bias=None):
        self.weight = weight                                   # (D_in, D_out)
        self.bias = (bias if bias is not None
                     else jnp.zeros((weight.shape[-1],), weight.dtype))

    def __call__(self, x):
        return x @ self.weight + self.bias


class PreNormPallas:
    """Mirror of the PyTorch PreNorm module: fn(LayerNorm(x), **kwargs)."""

    def __init__(self, dim, fn, param_dtype=jnp.float32):
        self.dim = dim
        self.fn = fn
        # nn.LayerNorm default init: weight = ones, bias = zeros.
        self.gamma = jnp.ones((dim,), param_dtype)
        self.beta = jnp.zeros((dim,), param_dtype)

    def __call__(self, x, **kwargs):
        if isinstance(self.fn, LinearFn) and not kwargs:
            # Fused path: LayerNorm + projection in a single HBM pass
            # (bf16 MXU operands, f32 accumulation).
            return prenorm_linear_pallas(x, self.gamma, self.beta,
                                         self.fn.weight, self.fn.bias)
        # Generic path: arbitrary fn runs in plain JAX on the LN kernel output.
        # TODO(synk): arbitrary `fn` callables (full Attention blocks, etc.)
        # cannot be fused into the kernel generically; only the linear case is.
        return self.fn(layernorm_pallas(x, self.gamma, self.beta), **kwargs)


if __name__ == "__main__":
    key = jax.random.PRNGKey(0)
    B, N, D = 2, 8, 32  # batch, tokens, hidden dim (small smoke-test shapes)

    kx, kw, kb = jax.random.split(key, 3)
    x = jax.random.normal(kx, (B, N, D), dtype=jnp.float32)

    # Deterministic "fn": a simple linear D -> D (stand-in for Attention/FeedForward).
    w = jax.random.normal(kw, (D, D), dtype=jnp.float32) * 0.02
    b = jax.random.normal(kb, (D,), dtype=jnp.float32) * 0.02

    module = PreNormPallas(D, LinearFn(w, b))
    out = jax.block_until_ready(module(x))

    # Plain-JAX references.
    mean = jnp.mean(x, axis=-1, keepdims=True)
    var = jnp.mean((x - mean) ** 2, axis=-1, keepdims=True)
    normed_ref = (x - mean) * jax.lax.rsqrt(var + LN_EPS) * module.gamma + module.beta
    ref = normed_ref @ w + b

    assert out.shape == (B, N, D)
    # Looser tolerance for the fused output: the projection intentionally uses
    # bf16 MXU operands (f32 accumulation) for v6e/v7x throughput.
    assert jnp.allclose(out, ref, atol=2e-2, rtol=2e-2)

    # Tight check of the LayerNorm kernel itself (generic-fn fallback path).
    normed = jax.block_until_ready(layernorm_pallas(x, module.gamma, module.beta))
    assert jnp.allclose(normed, normed_ref, atol=1e-5, rtol=1e-5)

    print("KERNEL_OK")
</pallas_src>

<mosaic_0001>
module attributes {stable_mosaic.version = 11 : i64} {
  func.func @_prenorm_linear_kernel(%arg0: i32, %arg1: i32, %arg2: memref<16x32xf32, #tpu.memory_space<vmem>>, %arg3: memref<1x32xf32, #tpu.memory_space<vmem>>, %arg4: memref<1x32xf32, #tpu.memory_space<vmem>>, %arg5: memref<32x32xbf16, #tpu.memory_space<vmem>>, %arg6: memref<1x32xf32, #tpu.memory_space<vmem>>, %arg7: memref<16x32xf32, #tpu.memory_space<vmem>>) attributes {dimension_semantics = [#tpu.dimension_semantics<parallel>, #tpu.dimension_semantics<arbitrary>], iteration_bounds = array<i64: 1, 1>, scalar_prefetch = 0 : i64, scratch_operands = 0 : i64, tpu.core_type = #tpu.core_type<tc>, window_params = [{transform_indices = @transform_0, window_bounds = array<i64: 16, 32>}, {pipeline_mode = #tpu.pipeline_mode<synchronous>, transform_indices = @transform_1, window_bounds = array<i64: 1, 32>}, {pipeline_mode = #tpu.pipeline_mode<synchronous>, transform_indices = @transform_2, window_bounds = array<i64: 1, 32>}, {pipeline_mode = #tpu.pipeline_mode<synchronous>, transform_indices = @transform_3, window_bounds = array<i64: 32, 32>}, {transform_indices = @transform_4, window_bounds = array<i64: 1, 32>}, {transform_indices = @transform_5, window_bounds = array<i64: 16, 32>}]} {
    %c0 = arith.constant 0 : index
    %c0_0 = arith.constant 0 : index
    %0 = vector.load %arg2[%c0, %c0_0] : memref<16x32xf32, #tpu.memory_space<vmem>>, vector<16x32xf32>
    %c0_1 = arith.constant 0 : index
    %c0_2 = arith.constant 0 : index
    %1 = vector.load %arg3[%c0_1, %c0_2] : memref<1x32xf32, #tpu.memory_space<vmem>>, vector<1x32xf32>
    %c0_3 = arith.constant 0 : index
    %c0_4 = arith.constant 0 : index
    %2 = vector.load %arg4[%c0_3, %c0_4] : memref<1x32xf32, #tpu.memory_space<vmem>>, vector<1x32xf32>
    %cst = arith.constant dense<0.000000e+00> : vector<16xf32>
    %3 = vector.multi_reduction <add>, %0, %cst [1] : vector<16x32xf32> to vector<16xf32>
    %4 = vector.shape_cast %3 : vector<16xf32> to vector<16x1xf32>
    %cst_5 = arith.constant 3.200000e+01 : f32
    %5 = vector.broadcast %cst_5 : f32 to vector<16x1xf32>
    %6 = arith.divf %4, %5 : vector<16x1xf32>
    %7 = arith.mulf %0, %0 : vector<16x32xf32>
    %cst_6 = arith.constant dense<0.000000e+00> : vector<16xf32>
    %8 = vector.multi_reduction <add>, %7, %cst_6 [1] : vector<16x32xf32> to vector<16xf32>
    %9 = vector.shape_cast %8 : vector<16xf32> to vector<16x1xf32>
    %cst_7 = arith.constant 3.200000e+01 : f32
    %10 = vector.broadcast %cst_7 : f32 to vector<16x1xf32>
    %11 = arith.divf %9, %10 : vector<16x1xf32>
    %12 = arith.mulf %6, %6 : vector<16x1xf32>
    %13 = arith.subf %11, %12 : vector<16x1xf32>
    %cst_8 = arith.constant 0.000000e+00 : f32
    %14 = vector.broadcast %cst_8 : f32 to vector<16x1xf32>
    %15 = arith.maximumf %13, %14 : vector<16x1xf32>
    %cst_9 = arith.constant 9.99999974E-6 : f32
    %16 = vector.broadcast %cst_9 : f32 to vector<16x1xf32>
    %17 = arith.addf %15, %16 : vector<16x1xf32>
    %18 = math.rsqrt %17 : vector<16x1xf32>
    %19 = vector.broadcast %6 : vector<16x1xf32> to vector<16x32xf32>
    %20 = arith.subf %0, %19 : vector<16x32xf32>
    %21 = vector.broadcast %18 : vector<16x1xf32> to vector<16x32xf32>
    %22 = arith.mulf %20, %21 : vector<16x32xf32>
    %23 = vector.broadcast %1 : vector<1x32xf32> to vector<16x32xf32>
    %24 = arith.mulf %22, %23 : vector<16x32xf32>
    %25 = vector.broadcast %2 : vector<1x32xf32> to vector<16x32xf32>
    %26 = arith.addf %24, %25 : vector<16x32xf32>
    %27 = arith.truncf %26 : vector<16x32xf32> to vector<16x32xbf16>
    %c0_10 = arith.constant 0 : index
    %c0_11 = arith.constant 0 : index
    %28 = vector.load %arg5[%c0_10, %c0_11] : memref<32x32xbf16, #tpu.memory_space<vmem>>, vector<32x32xbf16>
    %cst_12 = arith.constant dense<0.000000e+00> : vector<16x32xf32>
    %29 = tpu.matmul %27, %28, %cst_12 {dimension_numbers = #tpu.dot_dimension_numbers<[1], [0], [0], [1], [0, 0, 1, 1], [], []>} : vector<16x32xbf16>, vector<32x32xbf16>, vector<16x32xf32> -> vector<16x32xf32>
    %c0_13 = arith.constant 0 : index
    %c0_14 = arith.constant 0 : index
    %30 = vector.load %arg6[%c0_13, %c0_14] : memref<1x32xf32, #tpu.memory_space<vmem>>, vector<1x32xf32>
    %31 = vector.broadcast %30 : vector<1x32xf32> to vector<16x32xf32>
    %32 = arith.addf %29, %31 : vector<16x32xf32>
    %c0_15 = arith.constant 0 : index
    %c0_16 = arith.constant 0 : index
    %33 = vector.load %arg7[%c0_15, %c0_16] : memref<16x32xf32, #tpu.memory_space<vmem>>, vector<16x32xf32>
    tpu.vector_store %arg7[%c0_15, %c0_16], %32 {strides = array<i32>} : memref<16x32xf32, #tpu.memory_space<vmem>>, vector<16x32xf32>,
    return
  }
  func.func @transform_0(%arg0: i32, %arg1: i32) -> (i32, i32) {
    %c0_i32 = arith.constant 0 : i32
    %c0_i32_0 = arith.constant 0 : i32
    return %arg0, %c0_i32 : i32, i32
  }
  func.func @transform_1(%arg0: i32, %arg1: i32) -> (i32, i32) {
    %c0_i32 = arith.constant 0 : i32
    %c0_i32_0 = arith.constant 0 : i32
    %c0_i32_1 = arith.constant 0 : i32
    return %c0_i32, %c0_i32_0 : i32, i32
  }
  func.func @transform_2(%arg0: i32, %arg1: i32) -> (i32, i32) {
    %c0_i32 = arith.constant 0 : i32
    %c0_i32_0 = arith.constant 0 : i32
    %c0_i32_1 = arith.constant 0 : i32
    return %c0_i32, %c0_i32_0 : i32, i32
  }
  func.func @transform_3(%arg0: i32, %arg1: i32) -> (i32, i32) {
    %c0_i32 = arith.constant 0 : i32
    %c0_i32_0 = arith.constant 0 : i32
    %c0_i32_1 = arith.constant 0 : i32
    return %c0_i32, %c0_i32_0 : i32, i32
  }
  func.func @transform_4(%arg0: i32, %arg1: i32) -> (i32, i32) {
    %c0_i32 = arith.constant 0 : i32
    %c0_i32_0 = arith.constant 0 : i32
    return %c0_i32, %arg1 : i32, i32
  }
  func.func @transform_5(%arg0: i32, %arg1: i32) -> (i32, i32) {
    %c0_i32 = arith.constant 0 : i32
    return %arg0, %arg1 : i32, i32
  }
}

</mosaic_0001>

<llo_original>
// kernel: prenorm_linear_pallas.1
$region0: #{prenorm_linear_pallas.1}
  #allocation0 [shape = 'u32[]', space=smem, size = 0x4, offset = 0x4, fixed_abs, tag = 'smem constant byte address 0x4 - core index']
  #allocation1 [shape = 'u32[72,128]{1,0:T(1,128)}', space=vmem, size = 0x9000, scoped, tag = 'internal scratch']
  %s0 = inlined_call_operand.vmem [shape: f32[16,32], index: 0, kind: input, shape index: {}]
  %s1 = inlined_call_operand.vmem [shape: f32[1,32], index: 1, kind: input, shape index: {}]
  %s2 = inlined_call_operand.vmem [shape: f32[1,32], index: 2, kind: input, shape index: {}]
  %s3 = inlined_call_operand.vmem [shape: bf16[32,32], index: 3, kind: input, shape index: {}]
  %s4 = inlined_call_operand.vmem [shape: f32[1,32], index: 4, kind: input, shape index: {}]
  %s5 = inlined_call_operand.hbm [shape: f32[16,32], index: 5, kind: output, shape index: {}]
  %s6 = sld [smem:[#allocation0]]
  $region30: #{prenorm_linear_pallas.1} parent=0
    _
  %s8 = ssub.s32 1, %s6
  %s9 = scalar_select 0, %s8, %s6
  $region1: #{prenorm_linear_pallas.1} parent=0
    #allocation2 [shape = 'u8[8192]{0}', space=vmem, size = 0x2000, scoped, tag = 'output window, operand 0, single buffered']
    #allocation3 [shape = 's32[1]{0}', space=sflag, size = 0x4, scoped, tag = 'scoped memory for prenorm_linear_pallas.1']
    %10 = vsyncpa [#allocation3], 0
    // Predicated region
    $region2: #{prenorm_linear_pallas.1} parent=1 // pred_check
      _
    $region3: #{prenorm_linear_pallas.1} parent=1 // pred_check_branch
      %12 = sbr.rel (0) target = $region5
    $region4: #{prenorm_linear_pallas.1} parent=1 // pred_region
      _
    $region5: #{prenorm_linear_pallas.1} parent=1 // pred_fallthru
      _
    // Predicated region
    $region6: #{prenorm_linear_pallas.1} parent=1 // pred_check
      _
    $region7: #{prenorm_linear_pallas.1} parent=1 // pred_check_branch
      %14 = sbr.rel (0) target = $region9
    $region8: #{prenorm_linear_pallas.1} parent=1 // pred_region
      _
    $region9: #{prenorm_linear_pallas.1} parent=1 // pred_fallthru
      _
    // Predicated region
    $region10: #{prenorm_linear_pallas.1} parent=1 // pred_check
      _
    $region11: #{prenorm_linear_pallas.1} parent=1 // pred_check_branch
      %16 = sbr.rel (0) target = $region13
    $region12: #{prenorm_linear_pallas.1} parent=1 // pred_region
      _
    $region13: #{prenorm_linear_pallas.1} parent=1 // pred_fallthru
      _
    // Predicated region
    $region14: #{prenorm_linear_pallas.1} parent=1 // pred_check
      _
    $region15: #{prenorm_linear_pallas.1} parent=1 // pred_check_branch
      %18 = sbr.rel (0) target = $region17
    $region16: #{prenorm_linear_pallas.1} parent=1 // pred_region
      _
    $region17: #{prenorm_linear_pallas.1} parent=1 // pred_fallthru
      _
    // Predicated region
    $region18: #{prenorm_linear_pallas.1} parent=1 // pred_check
      _
    $region19: #{prenorm_linear_pallas.1} parent=1 // pred_check_branch
      %20 = sbr.rel (0) target = $region21
    $region20: #{prenorm_linear_pallas.1} parent=1 // pred_region
      _
    $region21: #{prenorm_linear_pallas.1} parent=1 // pred_fallthru
      _
    %v22 = vld [vmem:[%s0] sm:$0xff]
    %v23 = vld [vmem:[%s0 + $0x8] sm:$0xff]
    %v24 = vld [vmem:[%s1] sm:$0x1]
    %v25 = vld [vmem:[%s2] sm:$0x1]
    %vm26 = vcmask 261120
    %v27 = vsel %vm26, %v22, 0.0
    %28 = vadd.xlane.f32.xlu0 %v27
    %v29 = vpop.xlane.xlu0 %28
    %v30 = vsel %vm26, %v23, 0.0
    %31 = vadd.xlane.f32.xlu0 %v30
    %v32 = vpop.xlane.xlu0 %31
    %v33 = vrcp.pop 32.0
    %v34 = vmul.f32 32.0, %v33
    %v35 = vsub.f32 1.0, %v34
    %v36 = vmul.f32 %v33, %v35
    %v37 = vadd.f32 %v33, %v36
    %vm38 = vweird.f32 %v33
    %v39 = vsel %vm38, %v33, %v37
    %v40 = vmul.f32 %v29, %v39
    %v41 = vmul.f32 %v32, %v39
    %v42 = vmul.f32 %v22, %v22
    %v43 = vmul.f32 %v23, %v23
    %v44 = vsel %vm26, %v42, 0.0
    %45 = vadd.xlane.f32.xlu0 %v44
    %v46 = vpop.xlane.xlu0 %45
    %v47 = vsel %vm26, %v43, 0.0
    %48 = vadd.xlane.f32.xlu0 %v47
    %v49 = vpop.xlane.xlu0 %48
    %v50 = vmul.f32 %v46, %v39
    %v51 = vmul.f32 %v49, %v39
    %v52 = vmul.f32 %v40, %v40
    %v53 = vmul.f32 %v41, %v41
    %v54 = vsub.f32 %v50, %v52
    %v55 = vsub.f32 %v51, %v53
    %v56 = vmax.f32 %v54, 0.0
    %v57 = vmax.f32 %v55, 0.0
    %v58 = vadd.f32 %v56, 1e-05
    %v59 = vadd.f32 %v57, 1e-05
    %v60 = vrsqrt.pop %v58
    %v61 = vmul.f32 %v60, %v58
    %v62 = vmul.f32 %v61, %v60
    %v63 = vmul.f32 0.5, %v62
    %v64 = vsub.f32 1.5, %v63
    %v65 = vmul.f32 %v60, %v64
    %vm66 = vweird.f32 %v58
    %vm67 = vweird.f32 %v60
    %vm68 = vmor %vm66, %vm67
    %v69 = vsel %vm68, %v60, %v65
    %v70 = vrsqrt.pop %v59
    %v71 = vmul.f32 %v70, %v59
    %v72 = vmul.f32 %v71, %v70
    %v73 = vmul.f32 0.5, %v72
    %v74 = vsub.f32 1.5, %v73
    %v75 = vmul.f32 %v70, %v74
    %vm76 = vweird.f32 %v59
    %vm77 = vweird.f32 %v70
    %vm78 = vmor %vm76, %vm77
    %v79 = vsel %vm78, %v70, %v75
    %v80 = vsub.f32 %v22, %v40
    %v81 = vsub.f32 %v23, %v41
    %v82 = vmul.f32 %v80, %v69
    %v83 = vmul.f32 %v81, %v79
    %v85 = vperm.slane %v24, 0
    %v87 = vmul.f32 %v82, %v85
    %v88 = vmul.f32 %v83, %v85
    %v90 = vperm.slane %v25, 0
    %v92 = vadd.f32 %v87, %v90
    %v93 = vadd.f32 %v88, %v90
    %v94 = vpack.c.bf16 %v93, %v92
    %v95 = vld [vmem:[%s3] sm:$0xf]
    %v96 = vld [vmem:[%s3 + $0x4] sm:$0xf]
    %v97 = vld [vmem:[%s3 + $0x8] sm:$0xf]
    %v98 = vld [vmem:[%s3 + $0xc] sm:$0xf]
    %v99 = vld [vmem:[%s4] sm:$0x1]
    %v101 = vperm.slane %v99, 0
    %v107 = vunpack.c.l.b16 %v95
    %v108 = vunpack.c.l.b16 %v96
    %v109 = vunpack.c.l.b16 %v97
    %v110 = vunpack.c.l.b16 %v98
    %v111 = vpack.c.b16 %v108, %v107
    %v112 = vpack.c.b16 %v110, %v109
    %v116 = vsel %vm26, %v94, 0
    %118 = vmatpush.bf16.msra.mxu0 0
    %119 = vmatpush.bf16.msra.mxu0 0
    %120 = vmatpush.bf16.msra.mxu0 0
    %121 = vmatpush.bf16.msra.mxu0 0
    %122 = vmatpush.bf16.msra.mxu0 0
    %123 = vmatpush.bf16.msra.mxu0 0
    %124 = vmatpush.bf16.msra.mxu0 %v112
    %125 = vmatpush.bf16.msra.mxu0 %v111
    %126 = vmatmul.bf16.gmra.mxu0 %v116
    %v127 = vpop.f32.mrf.mxu0
    %v128 = vadd.f32 %v101, %v127
    %v129 = vpop.f32.mrf.mxu0
    %v130 = vadd.f32 %v101, %v129
    %131 = vdwg.mxu0
    %132 = vst.msk [vmem:[#allocation2] sm:$0xff] %vm26, %v128
    %133 = vst.msk [vmem:[#allocation2 + $0x8] sm:$0xff] %vm26, %v130
    // Predicated region
    $region22: #{prenorm_linear_pallas.1} parent=1 // pred_check
      _
    $region23: #{prenorm_linear_pallas.1} parent=1 // pred_check_branch
      %135 = sbr.rel (0) target = $region25
    $region24: #{prenorm_linear_pallas.1} parent=1 // pred_region
      %137 = vsyncadd [#allocation3], 0
      %s138 = sshll.u32 [#allocation2], 4
      %s139 = int_to_ptr.vmem [resolvable:$true] %s138
      %s140 = sshll.u32 %s5, 4
      %s141 = int_to_ptr.hbm [resolvable:$true] %s140
      %146 = dma.vmem_to_hbm [thread:$0]  %s139, 256, %s141, [#allocation3], 128, 128, 8
    $region25: #{prenorm_linear_pallas.1} parent=1 // pred_fallthru
      _
    // Predicated region
    $region26: #{prenorm_linear_pallas.1} parent=1 // pred_check
      _
    $region27: #{prenorm_linear_pallas.1} parent=1 // pred_check_branch
      %148 = sbr.rel (0) target = $region29
    $region28: #{prenorm_linear_pallas.1} parent=1 // pred_region
      %150 = dma.done [#allocation3], 256
    $region29: #{prenorm_linear_pallas.1} parent=1 // pred_fallthru
      _
    %151 = vsyncpa [#allocation3], 1

</llo_original>
